<compile_context>
chip_gen: v7x
topology: tpu7x:2x2x1
jax: 0.10.0
libtpu: 0.0.40
codegen_flags: <defaults>
</compile_context>

<pallas_src>
import functools

import jax
import jax.numpy as jnp
from jax.experimental import pallas as pl
from jax.experimental.pallas import tpu as pltpu

_SUBLANE = 8


def logreg_kernel(x_ref, w_ref, b_ref, o_ref):
    # x_ref: (TB, D_in), w_ref: (D_in, D_out), b_ref: (1, D_out), o_ref: (TB, D_out)
    acc = jnp.dot(x_ref[...], w_ref[...], preferred_element_type=jnp.float32)
    o_ref[...] = jax.nn.sigmoid(acc + b_ref[...]).astype(o_ref.dtype)


def _round_up(n, m):
    return ((n + m - 1) // m) * m


def _choose_tb(batch, tb_req):
    # Sublane-aligned tile, no larger than the (rounded-up) batch.
    tb = min(tb_req, _round_up(batch, _SUBLANE))
    tb = max(_round_up(tb, _SUBLANE), _SUBLANE)
    # v7x megacore: keep at least 2 batch tiles when the batch allows it.
    if batch > _SUBLANE:
        tb = min(tb, _round_up(pl.cdiv(batch, 2), _SUBLANE))
    # Cap so double-buffered tiles stay comfortably under v7x's 64 MiB VMEM.
    return min(tb, 8192)


@functools.partial(jax.jit, static_argnames=("tb",))
def logistic_regression(x, w_t, b, *, tb=4096):
    """x: [B, D_in] f32, w_t: [D_in, D_out] f32, b: [D_out] f32 -> [B, D_out] f32."""
    B, D_in = x.shape
    D_out = w_t.shape[1]

    tb_eff = _choose_tb(B, tb)
    grid = (pl.cdiv(B, tb_eff),)

    # VMEM budget: 2x double-buffered (x tile + out tile) + resident weight/bias
    # + headroom; floor 4 MiB, cap 32 MiB (safe on v7x's 64 MiB physical VMEM).
    tile_bytes = 2 * (tb_eff * D_in + tb_eff * D_out) * 4
    resident_bytes = (D_in * D_out + D_out) * 4 * 2
    vmem_limit = min(
        max(_round_up(tile_bytes + resident_bytes + (2 << 20), 1 << 20), 4 << 20),
        32 << 20,
    )

    b2 = b.reshape(1, D_out)

    return pl.pallas_call(
        logreg_kernel,
        out_shape=jax.ShapeDtypeStruct((B, D_out), jnp.float32),
        grid_spec=pl.GridSpec(
            grid=grid,
            in_specs=[
                pl.BlockSpec((tb_eff, D_in), lambda i: (i, 0)),   # batch-tiled x
                pl.BlockSpec((D_in, D_out), lambda i: (0, 0)),    # resident weight
                pl.BlockSpec((1, D_out), lambda i: (0, 0)),       # resident bias
            ],
            out_specs=pl.BlockSpec((tb_eff, D_out), lambda i: (i, 0)),
        ),
        compiler_params=pltpu.CompilerParams(
            dimension_semantics=("parallel",),   # shard batch tiles over v7x's 2 TCs
            vmem_limit_bytes=vmem_limit,
        ),
    )(x, w_t, b2)


if __name__ == "__main__":
    key = jax.random.PRNGKey(0)
    k_x, k_w, k_b, k_x2 = jax.random.split(key, 4)

    batch = 8
    input_dim = 32
    output_dim = 4

    x = jax.random.normal(k_x, (batch, input_dim), dtype=jnp.float32)
    # nn.Linear weight is [output_dim, input_dim]; pass it transposed to the kernel.
    bound = 1.0 / jnp.sqrt(input_dim)
    w = jax.random.uniform(k_w, (output_dim, input_dim),
                           minval=-bound, maxval=bound, dtype=jnp.float32)
    b = jax.random.uniform(k_b, (output_dim,),
                           minval=-bound, maxval=bound, dtype=jnp.float32)

    out = logistic_regression(x, w.T, b)
    out = jax.block_until_ready(out)
    ref = jax.nn.sigmoid(x @ w.T + b)
    assert out.shape == (batch, output_dim)
    assert jnp.allclose(out, ref, atol=1e-5, rtol=1e-5)

    # Secondary check: batch not a multiple of the tile / sublane, multi-tile grid,
    # exercising the masked partial last block (no wrapper-side batch pad).
    batch2 = 300
    x2 = jax.random.normal(k_x2, (batch2, input_dim), dtype=jnp.float32)
    out2 = jax.block_until_ready(logistic_regression(x2, w.T, b, tb=128))
    ref2 = jax.nn.sigmoid(x2 @ w.T + b)
    assert out2.shape == (batch2, output_dim)
    assert jnp.allclose(out2, ref2, atol=1e-5, rtol=1e-5)

    print("KERNEL_OK")
</pallas_src>

<mosaic_0001>
module attributes {stable_mosaic.version = 11 : i64} {
  func.func @logreg_kernel(%arg0: i32, %arg1: memref<8x32xf32, #tpu.memory_space<vmem>>, %arg2: memref<32x4xf32, #tpu.memory_space<vmem>>, %arg3: memref<1x4xf32, #tpu.memory_space<vmem>>, %arg4: memref<8x4xf32, #tpu.memory_space<vmem>>) attributes {dimension_semantics = [#tpu.dimension_semantics<parallel>], iteration_bounds = array<i64: 1>, scalar_prefetch = 0 : i64, scratch_operands = 0 : i64, tpu.core_type = #tpu.core_type<tc>, window_params = [{transform_indices = @transform_0, window_bounds = array<i64: 8, 32>}, {pipeline_mode = #tpu.pipeline_mode<synchronous>, transform_indices = @transform_1, window_bounds = array<i64: 32, 4>}, {pipeline_mode = #tpu.pipeline_mode<synchronous>, transform_indices = @transform_2, window_bounds = array<i64: 1, 4>}, {transform_indices = @transform_3, window_bounds = array<i64: 8, 4>}]} {
    %c0 = arith.constant 0 : index
    %c0_0 = arith.constant 0 : index
    %0 = vector.load %arg1[%c0, %c0_0] : memref<8x32xf32, #tpu.memory_space<vmem>>, vector<8x32xf32>
    %c0_1 = arith.constant 0 : index
    %c0_2 = arith.constant 0 : index
    %1 = vector.load %arg2[%c0_1, %c0_2] : memref<32x4xf32, #tpu.memory_space<vmem>>, vector<32x4xf32>
    %cst = arith.constant dense<0.000000e+00> : vector<8x4xf32>
    %2 = tpu.matmul %0, %1, %cst {dimension_numbers = #tpu.dot_dimension_numbers<[1], [0], [0], [1], [0, 0, 1, 1], [], []>} : vector<8x32xf32>, vector<32x4xf32>, vector<8x4xf32> -> vector<8x4xf32>
    %c0_3 = arith.constant 0 : index
    %c0_4 = arith.constant 0 : index
    %3 = vector.load %arg3[%c0_3, %c0_4] : memref<1x4xf32, #tpu.memory_space<vmem>>, vector<1x4xf32>
    %4 = vector.broadcast %3 : vector<1x4xf32> to vector<8x4xf32>
    %5 = arith.addf %2, %4 : vector<8x4xf32>
    %6 = arith.negf %5 : vector<8x4xf32>
    %7 = math.exp %6 : vector<8x4xf32>
    %cst_5 = arith.constant 1.000000e+00 : f32
    %8 = vector.broadcast %cst_5 : f32 to vector<8x4xf32>
    %9 = arith.addf %8, %7 : vector<8x4xf32>
    %10 = arith.divf %8, %9 : vector<8x4xf32>
    %c0_6 = arith.constant 0 : index
    %c0_7 = arith.constant 0 : index
    %11 = vector.load %arg4[%c0_6, %c0_7] : memref<8x4xf32, #tpu.memory_space<vmem>>, vector<8x4xf32>
    tpu.vector_store %arg4[%c0_6, %c0_7], %10 {strides = array<i32>} : memref<8x4xf32, #tpu.memory_space<vmem>>, vector<8x4xf32>,
    return
  }
  func.func @transform_0(%arg0: i32) -> (i32, i32) {
    %c0_i32 = arith.constant 0 : i32
    %c0_i32_0 = arith.constant 0 : i32
    return %arg0, %c0_i32 : i32, i32
  }
  func.func @transform_1(%arg0: i32) -> (i32, i32) {
    %c0_i32 = arith.constant 0 : i32
    %c0_i32_0 = arith.constant 0 : i32
    %c0_i32_1 = arith.constant 0 : i32
    return %c0_i32, %c0_i32_0 : i32, i32
  }
  func.func @transform_2(%arg0: i32) -> (i32, i32) {
    %c0_i32 = arith.constant 0 : i32
    %c0_i32_0 = arith.constant 0 : i32
    %c0_i32_1 = arith.constant 0 : i32
    return %c0_i32, %c0_i32_0 : i32, i32
  }
  func.func @transform_3(%arg0: i32) -> (i32, i32) {
    %c0_i32 = arith.constant 0 : i32
    %c0_i32_0 = arith.constant 0 : i32
    return %arg0, %c0_i32 : i32, i32
  }
}

</mosaic_0001>

<llo_original>
// kernel: logistic_regression.1
$region0: #{logistic_regression.1}
  #allocation0 [shape = 'u32[]', space=smem, size = 0x4, offset = 0x4, fixed_abs, tag = 'smem constant byte address 0x4 - core index']
  #allocation1 [shape = 'u32[144,128]{1,0:T(1,128)}', space=vmem, size = 0x12000, scoped, tag = 'internal scratch']
  %s0 = inlined_call_operand.vmem [shape: f32[8,32], index: 0, kind: input, shape index: {}]
  %s1 = inlined_call_operand.vmem [shape: f32[32,4], index: 1, kind: input, shape index: {}]
  %s2 = inlined_call_operand.vmem [shape: f32[1,4], index: 2, kind: input, shape index: {}]
  %s3 = inlined_call_operand.vmem [shape: f32[8,4], index: 3, kind: output, shape index: {}]
  %s4 = sld [smem:[#allocation0]]
  $region22: #{logistic_regression.1} parent=0
    _
  %s6 = ssub.s32 1, %s4
  %s7 = scalar_select 0, %s6, %s4
  // Predicated region
  $region2: #{logistic_regression.1} parent=0 // pred_check
    _
  $region3: #{logistic_regression.1} parent=0 // pred_check_branch
    %9 = sbr.rel (0) target = $region5
  $region4: #{logistic_regression.1} parent=0 // pred_region
    _
  $region5: #{logistic_regression.1} parent=0 // pred_fallthru
    _
  // Predicated region
  $region6: #{logistic_regression.1} parent=0 // pred_check
    _
  $region7: #{logistic_regression.1} parent=0 // pred_check_branch
    %11 = sbr.rel (0) target = $region9
  $region8: #{logistic_regression.1} parent=0 // pred_region
    _
  $region9: #{logistic_regression.1} parent=0 // pred_fallthru
    _
  // Predicated region
  $region10: #{logistic_regression.1} parent=0 // pred_check
    _
  $region11: #{logistic_regression.1} parent=0 // pred_check_branch
    %13 = sbr.rel (0) target = $region13
  $region12: #{logistic_regression.1} parent=0 // pred_region
    _
  $region13: #{logistic_regression.1} parent=0 // pred_fallthru
    _
  %v14 = vld [vmem:[%s0] sm:$0xff]
  %v15 = vld [vmem:[%s1] sm:$0xff]
  %v16 = vld [vmem:[%s1 + $0x8] sm:$0xff]
  %v17 = vld [vmem:[%s1 + $0x10] sm:$0xff]
  %v18 = vld [vmem:[%s1 + $0x18] sm:$0xff]
  %v19 = vld [vmem:[%s2] sm:$0x1]
  %v21 = vlaneseq
  %v22 = vshrl.u32 %v21, 7
  %v23 = vsub.s32 0, %v22
  %v24 = vrot.slane %v19, %v23
  %vm26 = vcmask 261120
  %v28 = vsel %vm26, %v14, 0
  %30 = vmatprep.subr.mxu0 0.0
  %31 = vmatpush1.msra.mxu0 %v15
  %32 = vmatprep.subr.mxu0 0.0
  %33 = vmatpush1.msra.mxu0 %v16
  %34 = vmatprep.subr.mxu0 0.0
  %35 = vmatpush1.msra.mxu0 %v17
  %36 = vmatprep.subr.mxu0 0.0
  %37 = vmatpush1.msra.mxu0 %v18
  %38 = vmatprep.subr.mxu0 0.0
  %39 = vmatpush1.msra.mxu0 0.0
  %40 = vmatprep.subr.mxu0 0.0
  %41 = vmatpush1.msra.mxu0 0.0
  %42 = vmatprep.subr.mxu0 0.0
  %43 = vmatpush1.msra.mxu0 0.0
  %44 = vmatprep.subr.mxu0 0.0
  %45 = vmatpush1.msra.mxu0 0.0
  %46 = vmatprep.subr.mxu0 0.0
  %47 = vmatpush1.msra.mxu0 0.0
  %48 = vmatprep.subr.mxu0 0.0
  %49 = vmatpush1.msra.mxu0 0.0
  %50 = vmatprep.subr.mxu0 0.0
  %51 = vmatpush1.msra.mxu0 0.0
  %52 = vmatprep.subr.mxu0 0.0
  %53 = vmatpush1.msra.mxu0 0.0
  %54 = vmatprep.subr.mxu0 0.0
  %55 = vmatpush1.msra.mxu0 0.0
  %56 = vmatprep.subr.mxu0 0.0
  %57 = vmatpush1.msra.mxu0 0.0
  %58 = vmatprep.subr.mxu0 0.0
  %59 = vmatpush1.msra.mxu0 0.0
  %60 = vmatprep.subr.mxu0 0.0
  %61 = vmatpush1.msra.mxu0 0.0
  %62 = vmatprep.subr.mxu0 0.0
  %63 = vmatpush1.msra.mxu0 0.0
  %64 = vmatprep.subr.mxu0 0.0
  %65 = vmatpush1.msra.mxu0 0.0
  %66 = vmatprep.subr.mxu0 0.0
  %67 = vmatpush1.msra.mxu0 0.0
  %68 = vmatprep.subr.mxu0 0.0
  %69 = vmatpush1.msra.mxu0 0.0
  %70 = vmatprep.subr.mxu0 0.0
  %71 = vmatpush1.msra.mxu0 0.0
  %72 = vmatprep.subr.mxu0 0.0
  %73 = vmatpush1.msra.mxu0 0.0
  %74 = vmatprep.subr.mxu0 0.0
  %75 = vmatpush1.msra.mxu0 0.0
  %76 = vmatprep.subr.mxu0 0.0
  %77 = vmatpush1.msra.mxu0 0.0
  %78 = vmatprep.subr.mxu0 0.0
  %79 = vmatpush1.msra.mxu0 0.0
  %80 = vmatprep.subr.mxu0 0.0
  %81 = vmatpush1.msra.mxu0 0.0
  %82 = vmatprep.subr.mxu0 0.0
  %83 = vmatpush1.msra.mxu0 0.0
  %84 = vmatprep.subr.mxu0 0.0
  %85 = vmatpush1.msra.mxu0 0.0
  %86 = vmatprep.subr.mxu0 0.0
  %87 = vmatpush1.msra.mxu0 0.0
  %88 = vmatprep.subr.mxu0 0.0
  %89 = vmatpush1.msra.mxu0 0.0
  %90 = vmatprep.subr.mxu0 0.0
  %91 = vmatpush1.msra.mxu0 0.0
  %92 = vmatprep.subr.mxu0 0.0
  %93 = vmatpush1.msra.mxu0 0.0
  %94 = vmatprep.mubr.f32.mxu0 0.0
  %95 = vmatmul.mubr.f32.gmra.mrb[0].mxu0 %v28
  %v96 = vpop.f32.mrb[0].mxu0
  %v97 = vadd.f32 %v24, %v96
  %v98 = vpop.f32.mrb[0].mxu0
  %99 = vdwg.mxu0
  %v100 = vxor.u32 %v97, 2147483648
  %v101 = vmul.f32 %v100, 1.442695
  %v102 = vpow.pop %v101
  %v103 = vadd.f32 %v102, 1.0
  %v104 = vrcp.pop %v103
  %v105 = vmul.f32 1.0, %v104
  %vm106 = vcmask 31744
  %107 = vst.msk [vmem:[%s3] sm:$0xff] %vm106, %v105
  // Predicated region
  $region14: #{logistic_regression.1} parent=0 // pred_check
    _
  $region15: #{logistic_regression.1} parent=0 // pred_check_branch
    %109 = sbr.rel (0) target = $region17
  $region16: #{logistic_regression.1} parent=0 // pred_region
    _
  $region17: #{logistic_regression.1} parent=0 // pred_fallthru
    _
  // Predicated region
  $region18: #{logistic_regression.1} parent=0 // pred_check
    _
  $region19: #{logistic_regression.1} parent=0 // pred_check_branch
    %111 = sbr.rel (0) target = $region21
  $region20: #{logistic_regression.1} parent=0 // pred_region
    _
  $region21: #{logistic_regression.1} parent=0 // pred_fallthru
    _

</llo_original>
